<compile_context>
chip_gen: v5e
topology: v5e:2x2
jax: 0.10.0
libtpu: 0.0.40
codegen_flags: <defaults>
</compile_context>

<pallas_src>
import functools

import jax
import jax.numpy as jnp
from jax import lax
from jax.experimental import pallas as pl
from jax.experimental.pallas import tpu as pltpu


def _round_up(x: int, m: int) -> int:
    return ((x + m - 1) // m) * m


# --------------------------------------------------------------------------
# Kernel: one grid step = one GEMM + bias + ReLU (everything on the MXU).
# --------------------------------------------------------------------------
def _dsconv_gemm_kernel(x_ref, w_ref, b_ref, o_ref):
    """o = relu(x @ w + b).

    x_ref : [Nb*Ho, Kc_pad]    row-im2col LHS, contraction dim padded to 128k
    w_ref : [Kc_pad, Wo*Cout]  fused depthwise+pointwise weights
    b_ref : [1, Wo*Cout]       fused bias (f32), Wo-tiled (lane-dense add)
    o_ref : [Nb*Ho, Wo*Cout]   lane-dense output
    """
    acc = jnp.dot(x_ref[...], w_ref[...], preferred_element_type=jnp.float32)
    o_ref[...] = jnp.maximum(acc + b_ref[...], 0.0).astype(o_ref.dtype)


# --------------------------------------------------------------------------
# Prepare (run once per weight update, NOT in the per-call forward path).
# --------------------------------------------------------------------------
def prepare_fused_params(
    dw_weight,            # [Cin, 1, K, K]  PyTorch depthwise layout
    dw_bias,              # [Cin]
    pw_weight,            # [Cout, Cin, 1, 1]
    pw_bias,              # [Cout]
    *,
    kernel_size: int,
    dw_stride: int = 1,
    dw_padding: int = 0,
    dilation: int = 1,
    height: int,
    width: int,
    compute_dtype=jnp.float32,
):
    """Fold depthwise taps + pointwise 1x1 conv + both biases into one GEMM.

    Returns:
      fused_w : [Kc_pad, Wo*Cout] with Kc_pad = round_up(K*Wp*Cin, 128).
                Row (kh*Wp + wi)*Cin + c, column wo*Cout + co holds
                dw_w[kh, kw, c] * pw_w[c, co] iff wi == wo*sw + kw*dil
                (zero rows appended for the lane/contraction padding).
      fused_b : [1, Wo*Cout] = tile(dw_b @ pw_w + pw_b, Wo), float32.
    """
    Cin = dw_weight.shape[0]
    Cout = pw_weight.shape[0]
    K = kernel_size
    sw = dw_stride
    dil = dilation
    Wp = width + 2 * dw_padding
    Wo = (Wp - dil * (K - 1) - 1) // sw + 1

    dw_w = jnp.transpose(dw_weight[:, 0, :, :], (1, 2, 0)).astype(jnp.float32)  # [K,K,Cin]
    pw_w = jnp.transpose(pw_weight[:, :, 0, 0], (1, 0)).astype(jnp.float32)     # [Cin,Cout]
    taps = dw_w[:, :, :, None] * pw_w[None, None]                               # [K,K,Cin,Cout]

    # Direct scatter of the banded structure (no dense selector einsum).
    fw = jnp.zeros((K, Wp, Cin, Wo, Cout), jnp.float32)
    wo = jnp.arange(Wo)
    for kh in range(K):            # prepare-time only; K*K is tiny
        for kw in range(K):
            wi = wo * sw + kw * dil                                       # [Wo]
            upd = jnp.broadcast_to(taps[kh, kw][None], (Wo, Cin, Cout))   # [Wo,Cin,Cout]
            fw = fw.at[kh, wi, :, wo, :].add(upd)

    Kc = K * Wp * Cin
    Kc_pad = _round_up(Kc, 128)
    fused_w = fw.reshape(Kc, Wo * Cout)
    fused_w = jnp.pad(fused_w, ((0, Kc_pad - Kc), (0, 0)))
    fused_w = fused_w.astype(compute_dtype)

    # (acc + dw_b) @ pw_w + pw_b == acc @ pw_w + (dw_b @ pw_w + pw_b)
    fused_b = dw_bias.astype(jnp.float32) @ pw_w + pw_bias.astype(jnp.float32)
    fused_b = jnp.tile(fused_b, Wo).reshape(1, Wo * Cout)
    return fused_w, fused_b


def _default_batch_block(N: int, Ho: int) -> int:
    """Pick Nb: >=2 grid steps when N allows (v7x has 2 TensorCores), keep
    M = Nb*Ho as large as possible (<=~256 rows), and Nb*Ho a multiple of 8
    whenever the grid has more than one step."""
    if N <= 1:
        return max(N, 1)
    divs = [d for d in range(1, N) if N % d == 0]          # proper divisors -> >=2 steps
    cands = [d for d in divs if (d * Ho) % 8 == 0]
    if not cands:
        return N
    below = [d for d in cands if d * Ho <= 256]
    return max(below) if below else min(cands)


# --------------------------------------------------------------------------
# Forward (per-call path): row-im2col glue + one pallas_call GEMM.
# --------------------------------------------------------------------------
@functools.partial(
    jax.jit,
    static_argnames=("kernel_size", "dw_stride", "dw_padding", "dilation", "batch_block"),
)
def depthwise_separable_conv2d_relu(
    x_nchw,               # [N, Cin, H, W]
    fused_w,              # [Kc_pad, Wo*Cout]  from prepare_fused_params
    fused_b,              # [1, Wo*Cout]
    *,
    kernel_size: int,
    dw_stride: int = 1,
    dw_padding: int = 0,
    dilation: int = 1,
    batch_block=None,
):
    N, Cin, H, W = x_nchw.shape
    K = kernel_size
    sh = sw = dw_stride
    dil = dilation

    # ---- glue: NCHW -> NHWC + spatial zero padding ----
    x = jnp.transpose(x_nchw, (0, 2, 3, 1))
    x = jnp.pad(x, ((0, 0), (dw_padding,) * 2, (dw_padding,) * 2, (0, 0)))
    Hp, Wp = H + 2 * dw_padding, W + 2 * dw_padding
    Ho = (Hp - dil * (K - 1) - 1) // sh + 1
    Wo = (Wp - dil * (K - 1) - 1) // sw + 1
    assert Ho >= 1 and Wo >= 1

    Kc = K * Wp * Cin
    Kc_pad = _round_up(Kc, 128)
    NoutL = fused_w.shape[1]
    assert fused_w.shape[0] == Kc_pad, (
        "fused_w was prepared for a different feature-map size / config")
    assert NoutL % Wo == 0
    Cout = NoutL // Wo

    # ---- glue: row-im2col (kh-shifted, sh-strided row views on the lane axis) ----
    rows = [
        lax.slice(
            x, (0, kh * dil, 0, 0),
            (N, kh * dil + (Ho - 1) * sh + 1, Wp, Cin),
            (1, sh, 1, 1),
        )
        for kh in range(K)
    ]                                                     # each [N, Ho, Wp, Cin]
    x_cat = jnp.stack(rows, axis=2).reshape(N, Ho, Kc)    # lane order (kh, wi, c)
    x_cat = jnp.pad(x_cat, ((0, 0), (0, 0), (0, Kc_pad - Kc)))
    x2d = x_cat.reshape(N * Ho, Kc_pad)

    # ---- grid / block shaping ----
    Nb = _default_batch_block(N, Ho) if batch_block is None else int(batch_block)
    assert N % Nb == 0, "batch_block must divide N"
    assert Nb == N or (Nb * Ho) % 8 == 0, "per-step output rows must be 8-aligned"
    grid = (N // Nb,)
    Mb = Nb * Ho

    # VMEM budget guard (v7x: 64 MiB physical, 32 MiB scoped default).
    x_item = jnp.dtype(x_nchw.dtype).itemsize
    w_item = jnp.dtype(fused_w.dtype).itemsize
    est_vmem = (2 * Mb * (Kc_pad + NoutL) * x_item       # double-buffered LHS + out
                + 2 * Kc_pad * NoutL * w_item            # (default) double-buffered weights
                + 2 * NoutL * 4)
    assert est_vmem <= 24 * 1024 * 1024, (
        "fused-weight variant exceeds the VMEM budget; "
        "TODO(synk): Wo-tiled banded-weight / im2col variant for large W")

    flops = 2 * (N * Ho) * Kc_pad * NoutL
    bytes_accessed = int(
        x2d.size * x_item + fused_w.size * w_item + fused_b.size * 4
        + (N * Ho) * NoutL * x_item
    )

    out2d = pl.pallas_call(
        _dsconv_gemm_kernel,
        out_shape=jax.ShapeDtypeStruct((N * Ho, NoutL), x_nchw.dtype),
        grid_spec=pltpu.PrefetchScalarGridSpec(
            num_scalar_prefetch=0,
            grid=grid,
            in_specs=[
                pl.BlockSpec((Mb, Kc_pad), lambda b: (b, 0)),
                pl.BlockSpec((Kc_pad, NoutL), lambda b: (0, 0)),
                pl.BlockSpec((1, NoutL), lambda b: (0, 0)),
            ],
            out_specs=pl.BlockSpec((Mb, NoutL), lambda b: (b, 0)),
        ),
        compiler_params=pltpu.CompilerParams(
            dimension_semantics=("parallel",),
            vmem_limit_bytes=32 * 1024 * 1024,
        ),
        cost_estimate=pl.CostEstimate(
            flops=flops, transcendentals=0, bytes_accessed=bytes_accessed),
    )(x2d, fused_w, fused_b)

    # ---- glue: lane-dense [N*Ho, Wo*Cout] -> NCHW ----
    out = out2d.reshape(N, Ho, Wo, Cout)
    return jnp.transpose(out, (0, 3, 1, 2))


# --------------------------------------------------------------------------
# Pure-JAX reference (PyTorch conv semantics, NCHW).
# --------------------------------------------------------------------------
def _reference(x_nchw, dw_w, dw_b, pw_w, pw_b, *, stride, padding, dilation):
    cin = x_nchw.shape[1]
    y = lax.conv_general_dilated(
        x_nchw, dw_w,
        window_strides=(stride, stride),
        padding=[(padding, padding), (padding, padding)],
        rhs_dilation=(dilation, dilation),
        dimension_numbers=("NCHW", "OIHW", "NCHW"),
        feature_group_count=cin,
    )
    y = y + dw_b[None, :, None, None]
    y = lax.conv_general_dilated(
        y, pw_w, (1, 1), [(0, 0), (0, 0)],
        dimension_numbers=("NCHW", "OIHW", "NCHW"),
    )
    y = y + pw_b[None, :, None, None]
    return jnp.maximum(y, 0.0)


if __name__ == "__main__":
    # Module config: in_channels=4, out_channels=8, kernel_size=3,
    # dw_stride=1, dw_padding=1, pw_stride=1, pw_padding=0, dilation=1, bias=True.
    N, Cin, H, W = 2, 4, 16, 16
    Cout, K = 8, 3
    dw_stride, dw_padding, dilation = 1, 1, 1

    key = jax.random.PRNGKey(0)
    kx, k1, k2, k3, k4 = jax.random.split(key, 5)

    x = jax.random.normal(kx, (N, Cin, H, W), dtype=jnp.float32)
    dw_weight = 0.2 * jax.random.normal(k1, (Cin, 1, K, K), dtype=jnp.float32)
    dw_bias = 0.1 * jax.random.normal(k2, (Cin,), dtype=jnp.float32)
    pw_weight = 0.2 * jax.random.normal(k3, (Cout, Cin, 1, 1), dtype=jnp.float32)
    pw_bias = 0.1 * jax.random.normal(k4, (Cout,), dtype=jnp.float32)

    # Weight folding is hoisted out of the per-call path (once per weight update).
    fused_w, fused_b = prepare_fused_params(
        dw_weight, dw_bias, pw_weight, pw_bias,
        kernel_size=K, dw_stride=dw_stride, dw_padding=dw_padding,
        dilation=dilation, height=H, width=W, compute_dtype=jnp.float32,
    )

    out = depthwise_separable_conv2d_relu(
        x, fused_w, fused_b,
        kernel_size=K, dw_stride=dw_stride, dw_padding=dw_padding,
        dilation=dilation,
    )
    out = jax.block_until_ready(out)

    ref = _reference(
        x, dw_weight, dw_bias, pw_weight, pw_bias,
        stride=dw_stride, padding=dw_padding, dilation=dilation,
    )
    assert out.shape == ref.shape, (out.shape, ref.shape)
    assert jnp.allclose(out, ref, atol=1e-4, rtol=1e-4), float(
        jnp.max(jnp.abs(out - ref))
    )

    print("KERNEL_OK")
</pallas_src>

<mosaic_0001>
module attributes {stable_mosaic.version = 11 : i64} {
  func.func @_dsconv_gemm_kernel(%arg0: i32, %arg1: memref<16x256xf32, #tpu.memory_space<vmem>>, %arg2: memref<256x128xf32, #tpu.memory_space<vmem>>, %arg3: memref<1x128xf32, #tpu.memory_space<vmem>>, %arg4: memref<16x128xf32, #tpu.memory_space<vmem>>) attributes {dimension_semantics = [#tpu.dimension_semantics<parallel>], iteration_bounds = array<i64: 2>, scalar_prefetch = 0 : i64, scratch_operands = 0 : i64, tpu.core_type = #tpu.core_type<tc>, window_params = [{transform_indices = @transform_0, window_bounds = array<i64: 16, 256>}, {pipeline_mode = #tpu.pipeline_mode<synchronous>, transform_indices = @transform_1, window_bounds = array<i64: 256, 128>}, {pipeline_mode = #tpu.pipeline_mode<synchronous>, transform_indices = @transform_2, window_bounds = array<i64: 1, 128>}, {transform_indices = @transform_3, window_bounds = array<i64: 16, 128>}]} {
    %c0 = arith.constant 0 : index
    %c0_0 = arith.constant 0 : index
    %0 = vector.load %arg1[%c0, %c0_0] : memref<16x256xf32, #tpu.memory_space<vmem>>, vector<16x256xf32>
    %c0_1 = arith.constant 0 : index
    %c0_2 = arith.constant 0 : index
    %1 = vector.load %arg2[%c0_1, %c0_2] : memref<256x128xf32, #tpu.memory_space<vmem>>, vector<256x128xf32>
    %cst = arith.constant dense<0.000000e+00> : vector<16x128xf32>
    %2 = tpu.matmul %0, %1, %cst {dimension_numbers = #tpu.dot_dimension_numbers<[1], [0], [0], [1], [0, 0, 1, 1], [], []>} : vector<16x256xf32>, vector<256x128xf32>, vector<16x128xf32> -> vector<16x128xf32>
    %c0_3 = arith.constant 0 : index
    %c0_4 = arith.constant 0 : index
    %3 = vector.load %arg3[%c0_3, %c0_4] : memref<1x128xf32, #tpu.memory_space<vmem>>, vector<1x128xf32>
    %4 = vector.broadcast %3 : vector<1x128xf32> to vector<16x128xf32>
    %5 = arith.addf %2, %4 : vector<16x128xf32>
    %cst_5 = arith.constant 0.000000e+00 : f32
    %6 = vector.broadcast %cst_5 : f32 to vector<16x128xf32>
    %7 = arith.maximumf %5, %6 : vector<16x128xf32>
    %c0_6 = arith.constant 0 : index
    %c0_7 = arith.constant 0 : index
    %8 = vector.load %arg4[%c0_6, %c0_7] : memref<16x128xf32, #tpu.memory_space<vmem>>, vector<16x128xf32>
    tpu.vector_store %arg4[%c0_6, %c0_7], %7 {strides = array<i32>} : memref<16x128xf32, #tpu.memory_space<vmem>>, vector<16x128xf32>,
    return
  }
  func.func @transform_0(%arg0: i32) -> (i32, i32) {
    %c0_i32 = arith.constant 0 : i32
    %c0_i32_0 = arith.constant 0 : i32
    return %arg0, %c0_i32 : i32, i32
  }
  func.func @transform_1(%arg0: i32) -> (i32, i32) {
    %c0_i32 = arith.constant 0 : i32
    %c0_i32_0 = arith.constant 0 : i32
    %c0_i32_1 = arith.constant 0 : i32
    return %c0_i32, %c0_i32_0 : i32, i32
  }
  func.func @transform_2(%arg0: i32) -> (i32, i32) {
    %c0_i32 = arith.constant 0 : i32
    %c0_i32_0 = arith.constant 0 : i32
    %c0_i32_1 = arith.constant 0 : i32
    return %c0_i32, %c0_i32_0 : i32, i32
  }
  func.func @transform_3(%arg0: i32) -> (i32, i32) {
    %c0_i32 = arith.constant 0 : i32
    %c0_i32_0 = arith.constant 0 : i32
    return %arg0, %c0_i32 : i32, i32
  }
}

</mosaic_0001>

<llo_original>
// kernel: depthwise_separable_conv2d_relu.1
$region0: #{depthwise_separable_conv2d_relu.1}
  #allocation0 [shape = 'u32[]', space=smem, size = 0x4, offset = 0x4, fixed_abs, tag = 'smem constant byte address 0x4 - core index']
  #allocation1 [shape = 'u32[72,128]{1,0:T(1,128)}', space=vmem, size = 0x9000, scoped, tag = 'internal scratch']
  %s0 = inlined_call_operand.vmem [shape: f32[32,256], index: 0, kind: input, shape index: {}]
  %s1 = inlined_call_operand.vmem [shape: f32[256,128], index: 1, kind: input, shape index: {}]
  %s2 = inlined_call_operand.vmem [shape: f32[1,128], index: 2, kind: input, shape index: {}]
  %s3 = inlined_call_operand.vmem [shape: f32[32,128], index: 3, kind: output, shape index: {}]
  %s4 = sld [smem:[#allocation0]]
  $region45: #{depthwise_separable_conv2d_relu.1} parent=0
    _
  %s6 = ssub.s32 1, %s4
  %s7 = scalar_select 0, %s6, %s4
  loop: start=0, step=1, limit=4
  $region2: #{depthwise_separable_conv2d_relu.1} parent=0 // loop_pre_header
    _
  $region3: #{depthwise_separable_conv2d_relu.1} parent=0 // loop_header
    %s9 = sphi 0, %s13
    %p10 = scmp.ge.s32.totalorder %s9, 4
    %s19 = sphi 0, %s21
    %s22 = sphi 0, %s19
    %s23 = sphi 0, %s22
    %s39 = sphi 0, %s23
    %s43 = sphi 0, %s43
    %s45 = sphi 0, %s43
    %s46 = sphi 0, %s45
    %s60 = sphi 0, %s46
    %s64 = sphi 0, %s64
    %s66 = sphi 0, %s64
    %s67 = sphi 0, %s66
    %s81 = sphi 0, %s67
    %s87 = sphi 0, %s89
    %s90 = sphi 0, %s87
    %s91 = sphi 0, %s90
    %s107 = sphi 0, %s91
  $region4: #{depthwise_separable_conv2d_relu.1} parent=0 // loop_header_branch
    %12 = sbr.rel (%p10) target = $region8
  $region5: #{depthwise_separable_conv2d_relu.1} parent=0 // loop_body
    %s14 = ssub.s32 %s9, 1
    %s15 = ssub.s32 %s9, 2
    %s16 = sadd.s32 %s9, 1
    %s17 = ssub.s32 %s9, %s16
    %p18 = scmp.eq.s32.totalorder %s17, 0
    %s20 = sadd.s32 %s19, 1
    %s21 = scalar_select %p18, %s19, %s20
    %p24 = pneg %p18
    %p25 = scmp.eq.s32.totalorder %s9, 1
    %p26 = por %p24, %p25
    %p27 = scmp.ne.s32.totalorder %s19, %s22
    %p28 = scmp.eq.s32.totalorder %s9, 0
    %p29 = por %p27, %p28
    %p30 = scmp.ne.s32.totalorder %s19, %s22
    %p31 = scmp.eq.s32.totalorder %s14, 1
    %p32 = por %p30, %p31
    %p33 = scmp.ne.s32.totalorder %s22, %s23
    %p34 = scmp.eq.s32.totalorder %s14, 0
    %p35 = por %p33, %p34
    %p36 = scmp.ne.s32.totalorder %s22, %s23
    %p37 = scmp.eq.s32.totalorder %s15, 1
    %p38 = por %p36, %p37
    %p40 = scmp.ne.s32.totalorder %s23, %s39
    %p41 = scmp.eq.s32.totalorder %s15, 0
    %p42 = por %p40, %p41
    %s44 = sadd.s32 %s43, 1
    %p47 = scmp.eq.s32.totalorder %s9, 1
    %p48 = scmp.ne.s32.totalorder %s43, %s45
    %p49 = scmp.eq.s32.totalorder %s9, 0
    %p50 = por %p48, %p49
    %p51 = scmp.ne.s32.totalorder %s43, %s45
    %p52 = scmp.eq.s32.totalorder %s14, 1
    %p53 = por %p51, %p52
    %p54 = scmp.ne.s32.totalorder %s45, %s46
    %p55 = scmp.eq.s32.totalorder %s14, 0
    %p56 = por %p54, %p55
    %p57 = scmp.ne.s32.totalorder %s45, %s46
    %p58 = scmp.eq.s32.totalorder %s15, 1
    %p59 = por %p57, %p58
    %p61 = scmp.ne.s32.totalorder %s46, %s60
    %p62 = scmp.eq.s32.totalorder %s15, 0
    %p63 = por %p61, %p62
    %s65 = sadd.s32 %s64, 1
    %p68 = scmp.eq.s32.totalorder %s9, 1
    %p69 = scmp.ne.s32.totalorder %s64, %s66
    %p70 = scmp.eq.s32.totalorder %s9, 0
    %p71 = por %p69, %p70
    %p72 = scmp.ne.s32.totalorder %s64, %s66
    %p73 = scmp.eq.s32.totalorder %s14, 1
    %p74 = por %p72, %p73
    %p75 = scmp.ne.s32.totalorder %s66, %s67
    %p76 = scmp.eq.s32.totalorder %s14, 0
    %p77 = por %p75, %p76
    %p78 = scmp.ne.s32.totalorder %s66, %s67
    %p79 = scmp.eq.s32.totalorder %s15, 1
    %p80 = por %p78, %p79
    %p82 = scmp.ne.s32.totalorder %s67, %s81
    %p83 = scmp.eq.s32.totalorder %s15, 0
    %p84 = por %p82, %p83
    %s85 = ssub.s32 %s9, %s16
    %p86 = scmp.eq.s32.totalorder %s85, 0
    %s88 = sadd.s32 %s87, 1
    %s89 = scalar_select %p86, %s87, %s88
    %p92 = pneg %p86
    %p93 = scmp.eq.s32.totalorder %s9, 1
    %p94 = por %p92, %p93
    %p95 = scmp.ne.s32.totalorder %s87, %s90
    %p96 = scmp.eq.s32.totalorder %s9, 0
    %p97 = por %p95, %p96
    %p98 = scmp.ne.s32.totalorder %s87, %s90
    %p99 = scmp.eq.s32.totalorder %s14, 1
    %p100 = por %p98, %p99
    %p101 = scmp.ne.s32.totalorder %s90, %s91
    %p102 = scmp.eq.s32.totalorder %s14, 0
    %p103 = por %p101, %p102
    %p104 = scmp.ne.s32.totalorder %s90, %s91
    %p105 = scmp.eq.s32.totalorder %s15, 1
    %p106 = por %p104, %p105
    %p108 = scmp.ne.s32.totalorder %s91, %s107
    %p109 = scmp.eq.s32.totalorder %s15, 0
    %p110 = por %p108, %p109
    %p111 = scmp.le.s32.totalorder 1, %s9
    %p112 = scmp.lt.s32.totalorder %s9, 3
    %p113 = pnand %p111, %p112
    %p114 = pneg %p113
    // Predicated region
    $region9: #{depthwise_separable_conv2d_relu.1} parent=5 // pred_check
      _
    $region10: #{depthwise_separable_conv2d_relu.1} parent=5 // pred_check_branch
      %116 = sbr.rel (%p113) target = $region12
    $region11: #{depthwise_separable_conv2d_relu.1} parent=5 // pred_region
      %s117 = ssub.s32 %s9, 1
      // Predicated region
      $region13: #{depthwise_separable_conv2d_relu.1} parent=11 // pred_check
        %p118 = pneg %p56
      $region14: #{depthwise_separable_conv2d_relu.1} parent=11 // pred_check_branch
        %120 = sbr.rel (%p118) target = $region16
      $region15: #{depthwise_separable_conv2d_relu.1} parent=11 // pred_region
        _
      $region16: #{depthwise_separable_conv2d_relu.1} parent=11 // pred_fallthru
        _
      // Predicated region
      $region17: #{depthwise_separable_conv2d_relu.1} parent=11 // pred_check
        %p121 = pneg %p77
      $region18: #{depthwise_separable_conv2d_relu.1} parent=11 // pred_check_branch
        %123 = sbr.rel (%p121) target = $region20
      $region19: #{depthwise_separable_conv2d_relu.1} parent=11 // pred_region
        _
      $region20: #{depthwise_separable_conv2d_relu.1} parent=11 // pred_fallthru
        _
    $region12: #{depthwise_separable_conv2d_relu.1} parent=5 // pred_fallthru
      _
    %p124 = scmp.lt.s32.totalorder %s9, 2
    // Predicated region
    $region21: #{depthwise_separable_conv2d_relu.1} parent=5 // pred_check
      %p125 = pneg %p124
    $region22: #{depthwise_separable_conv2d_relu.1} parent=5 // pred_check_branch
      %127 = sbr.rel (%p125) target = $region24
    $region23: #{depthwise_separable_conv2d_relu.1} parent=5 // pred_region
      // Predicated region
      $region25: #{depthwise_separable_conv2d_relu.1} parent=23 // pred_check
        %p128 = pneg %p29
      $region26: #{depthwise_separable_conv2d_relu.1} parent=23 // pred_check_branch
        %130 = sbr.rel (%p128) target = $region28
      $region27: #{depthwise_separable_conv2d_relu.1} parent=23 // pred_region
        %s131 = smul.u32 2, %s9
        %p132 = scmp.lt.s32.totalorder %s131, 3
        %s133 = scalar_select %p132, %s131, 3
        %s134 = smul.addr %s133, 2
        %s135 = smul.addr %s134, 8
        %s136 = scalar_lea.vmem %s0, %s135
        %s137 = smul.u32 2, %s9
      $region28: #{depthwise_separable_conv2d_relu.1} parent=23 // pred_fallthru
        _
    $region24: #{depthwise_separable_conv2d_relu.1} parent=5 // pred_fallthru
      _
    %p138 = scmp.le.s32.totalorder 1, %s9
    %p139 = scmp.lt.s32.totalorder %s9, 3
    %p140 = pnand %p138, %p139
    %p141 = pneg %p140
    // Predicated region
    $region29: #{depthwise_separable_conv2d_relu.1} parent=5 // pred_check
      _
    $region30: #{depthwise_separable_conv2d_relu.1} parent=5 // pred_check_branch
      %143 = sbr.rel (%p140) target = $region32
    $region31: #{depthwise_separable_conv2d_relu.1} parent=5 // pred_region
      %s144 = ssub.s32 %s9, 1
      %s145 = smul.u32 2, %s14
      %p146 = scmp.lt.s32.totalorder %s145, 3
      %s147 = scalar_select %p146, %s145, 3
      %s148 = smul.addr %s147, 2
      %s149 = smul.addr %s148, 8
      %s150 = scalar_lea.vmem %s0, %s149
      %p151 = pneg %p35
      %p152 = pneg %p32
      %p153 = pneg %p56
      %p154 = pneg %p53
      %p155 = pneg %p77
      %p156 = pneg %p74
      %p157 = pneg %p103
      %p158 = pneg %p100
      %s159 = smul.u32 2, %s14
      %p160 = scmp.lt.s32.totalorder %s159, 3
      %s161 = scalar_select %p160, %s159, 3
      %s162 = smul.addr %s161, 8
      %s163 = scalar_lea.vmem %s3, %s162
      %s164 = smul.u32 2, %s14
      %p165 = scmp.lt.s32.totalorder %s164, 3
      %s166 = scalar_select %p165, %s164, 3
      %s167 = smul.addr %s166, 2
      %s168 = smul.addr %s167, 8
      %s169 = scalar_lea.vmem %s0, %s168
      %s170 = smul.u32 2, %s14
      %s171 = smul.u32 2, %s14
      %p172 = scmp.lt.s32.totalorder %s171, 3
      %s173 = scalar_select %p172, %s171, 3
      %s174 = smul.addr %s173, 8
      %s175 = scalar_lea.vmem %s3, %s174
      %s176 = smul.u32 2, %s14
      %v177 = vld [vmem:[%s169] sm:$0xff]
      %v178 = vld [vmem:[%s169 + $0x8] sm:$0xff]
      %v179 = vld [vmem:[%s169 + $0x10] sm:$0xff]
      %v180 = vld [vmem:[%s169 + $0x18] sm:$0xff]
      %v181 = vld [vmem:[%s1] sm:$0xff]
      %v182 = vld [vmem:[%s1 + $0x8] sm:$0xff]
      %v183 = vld [vmem:[%s1 + $0x10] sm:$0xff]
      %v184 = vld [vmem:[%s1 + $0x18] sm:$0xff]
      %v185 = vld [vmem:[%s1 + $0x20] sm:$0xff]
      %v186 = vld [vmem:[%s1 + $0x28] sm:$0xff]
      %v187 = vld [vmem:[%s1 + $0x30] sm:$0xff]
      %v188 = vld [vmem:[%s1 + $0x38] sm:$0xff]
      %v189 = vld [vmem:[%s1 + $0x40] sm:$0xff]
      %v190 = vld [vmem:[%s1 + $0x48] sm:$0xff]
      %v191 = vld [vmem:[%s1 + $0x50] sm:$0xff]
      %v192 = vld [vmem:[%s1 + $0x58] sm:$0xff]
      %v193 = vld [vmem:[%s1 + $0x60] sm:$0xff]
      %v194 = vld [vmem:[%s1 + $0x68] sm:$0xff]
      %v195 = vld [vmem:[%s1 + $0x70] sm:$0xff]
      %v196 = vld [vmem:[%s1 + $0x78] sm:$0xff]
      %v197 = vld [vmem:[%s1 + $0x80] sm:$0xff]
      %v198 = vld [vmem:[%s1 + $0x88] sm:$0xff]
      %v199 = vld [vmem:[%s1 + $0x90] sm:$0xff]
      %v200 = vld [vmem:[%s1 + $0x98] sm:$0xff]
      %v201 = vld [vmem:[%s1 + $0xa0] sm:$0xff]
      %v202 = vld [vmem:[%s1 + $0xa8] sm:$0xff]
      %v203 = vld [vmem:[%s1 + $0xb0] sm:$0xff]
      %v204 = vld [vmem:[%s1 + $0xb8] sm:$0xff]
      %v205 = vld [vmem:[%s1 + $0xc0] sm:$0xff]
      %v206 = vld [vmem:[%s1 + $0xc8] sm:$0xff]
      %v207 = vld [vmem:[%s1 + $0xd0] sm:$0xff]
      %v208 = vld [vmem:[%s1 + $0xd8] sm:$0xff]
      %v209 = vld [vmem:[%s1 + $0xe0] sm:$0xff]
      %v210 = vld [vmem:[%s1 + $0xe8] sm:$0xff]
      %v211 = vld [vmem:[%s1 + $0xf0] sm:$0xff]
      %v212 = vld [vmem:[%s1 + $0xf8] sm:$0xff]
      %v213 = vld [vmem:[%s2] sm:$0x1]
      %v215 = vperm.slane %v213, 0
      %217 = vmatpush.msra.mxu0 %v196
      %218 = vmatpush.msra.mxu0 %v195
      %219 = vmatpush.msra.mxu0 %v194
      %220 = vmatpush.msra.mxu0 %v193
      %221 = vmatpush.msra.mxu0 %v192
      %222 = vmatpush.msra.mxu0 %v191
      %223 = vmatpush.msra.mxu0 %v190
      %224 = vmatpush.msra.mxu0 %v189
      %225 = vmatpush.msra.mxu0 %v188
      %226 = vmatpush.msra.mxu0 %v187
      %227 = vmatpush.msra.mxu0 %v186
      %228 = vmatpush.msra.mxu0 %v185
      %229 = vmatpush.msra.mxu0 %v184
      %230 = vmatpush.msra.mxu0 %v183
      %231 = vmatpush.msra.mxu0 %v182
      %232 = vmatpush.msra.mxu0 %v181
      %233 = vmatmul.f32.gmra.mxu0 %v177
      %v234 = vpop.f32.mrf.mxu0
      %v235 = vadd.f32 %v215, %v234
      %236 = vmatmul.f32.gmra.mxu0 %v179
      %v237 = vpop.f32.mrf.mxu0
      %v238 = vadd.f32 %v215, %v237
      %239 = vdwg.mxu0
      %240 = vmatpush.msra.mxu0 %v212
      %241 = vmatpush.msra.mxu0 %v211
      %242 = vmatpush.msra.mxu0 %v210
      %243 = vmatpush.msra.mxu0 %v209
      %244 = vmatpush.msra.mxu0 %v208
      %245 = vmatpush.msra.mxu0 %v207
      %246 = vmatpush.msra.mxu0 %v206
      %247 = vmatpush.msra.mxu0 %v205
      %248 = vmatpush.msra.mxu0 %v204
      %249 = vmatpush.msra.mxu0 %v203
      %250 = vmatpush.msra.mxu0 %v202
      %251 = vmatpush.msra.mxu0 %v201
      %252 = vmatpush.msra.mxu0 %v200
      %253 = vmatpush.msra.mxu0 %v199
      %254 = vmatpush.msra.mxu0 %v198
      %255 = vmatpush.msra.mxu0 %v197
      %256 = vmatmul.f32.gmra.mxu0 %v178
      %v257 = vpop.f32.mrf.mxu0
      %v258 = vadd.f32 %v235, %v257
      %259 = vmatmul.f32.gmra.mxu0 %v180
      %v260 = vpop.f32.mrf.mxu0
      %v261 = vadd.f32 %v238, %v260
      %262 = vdwg.mxu0
      %v263 = vmax.f32 %v258, 0.0
      %v264 = vmax.f32 %v261, 0.0
      %265 = vst [vmem:[%s175] sm:$0xff] %v263
      %266 = vst [vmem:[%s175 + $0x8] sm:$0xff] %v264
      %s267 = smul.u32 2, %s14
      %p268 = scmp.lt.s32.totalorder %s267, 3
      %s269 = scalar_select %p268, %s267, 3
      %s270 = smul.addr %s269, 8
      %s271 = scalar_lea.vmem %s3, %s270
      // Predicated region
      $region33: #{depthwise_separable_conv2d_relu.1} parent=31 // pred_check
        %p272 = pneg %p100
      $region34: #{depthwise_separable_conv2d_relu.1} parent=31 // pred_check_branch
        %274 = sbr.rel (%p272) target = $region36
      $region35: #{depthwise_separable_conv2d_relu.1} parent=31 // pred_region
        %s275 = smul.u32 2, %s14
      $region36: #{depthwise_separable_conv2d_relu.1} parent=31 // pred_fallthru
        _
    $region32: #{depthwise_separable_conv2d_relu.1} parent=5 // pred_fallthru
      _
    %p276 = scmp.le.s32.totalorder 2, %s9
    // Predicated region
    $region37: #{depthwise_separable_conv2d_relu.1} parent=5 // pred_check
      %p277 = pneg %p276
    $region38: #{depthwise_separable_conv2d_relu.1} parent=5 // pred_check_branch
      %279 = sbr.rel (%p277) target = $region40
    $region39: #{depthwise_separable_conv2d_relu.1} parent=5 // pred_region
      %s280 = ssub.s32 %s9, 2
      // Predicated region
      $region41: #{depthwise_separable_conv2d_relu.1} parent=39 // pred_check
        %p281 = pneg %p106
      $region42: #{depthwise_separable_conv2d_relu.1} parent=39 // pred_check_branch
        %283 = sbr.rel (%p281) target = $region44
      $region43: #{depthwise_separable_conv2d_relu.1} parent=39 // pred_region
        %s284 = smul.u32 2, %s15
        %p285 = scmp.lt.s32.totalorder %s284, 3
        %s286 = scalar_select %p285, %s284, 3
        %s287 = smul.addr %s286, 8
        %s288 = scalar_lea.vmem %s3, %s287
      $region44: #{depthwise_separable_conv2d_relu.1} parent=39 // pred_fallthru
        _
    $region40: #{depthwise_separable_conv2d_relu.1} parent=5 // pred_fallthru
      _
  $region6: #{depthwise_separable_conv2d_relu.1} parent=0 // loop_footer
    %s13 = sadd.s32 1, %s9
  $region7: #{depthwise_separable_conv2d_relu.1} parent=0 // loop_footer_branch
    %8 = sbr.rel target = $region3
  $region8: #{depthwise_separable_conv2d_relu.1} parent=0 // loop_exit
    _

</llo_original>
